<compile_context>
chip_gen: v6e
topology: v6e:2x2x1
jax: 0.10.0
libtpu: 0.0.40
codegen_flags: <defaults>
</compile_context>

<pallas_src>
import math

import jax
import jax.numpy as jnp
from jax.experimental import pallas as pl
from jax.experimental.pallas import tpu as pltpu


# ----------------------------------------------------------------------------
# Kernel factory
# ----------------------------------------------------------------------------
def _make_linear_fa_kernel(has_bias: bool, use_acc_scratch: bool,
                           rhs_contract_dim: int):
    """One (i, j, k) grid step of  out = x @ W(.T) + b.

    rhs_contract_dim == 1: weight tile is (bn, bk)   (native (N, K) layout)
    rhs_contract_dim == 0: weight tile is (bk, bn)   (pre-transposed (K, N))

    use_acc_scratch == False (f32 output): accumulate straight into the output
    tile, which is resident across the K axis (its index_map ignores k); the
    bias is folded into the k == 0 init, so there is no finalize pass at all.
    """
    dnums = (((1,), (rhs_contract_dim,)), ((), ()))

    def kernel(x_ref, w_ref, *refs):
        if has_bias:
            b_ref = refs[0]
            refs = refs[1:]
        else:
            b_ref = None
        o_ref = refs[0]
        acc_ref = refs[1] if use_acc_scratch else o_ref

        k = pl.program_id(2)

        @pl.when(k == 0)
        def _init():
            if (b_ref is not None) and (not use_acc_scratch):
                # Fold the bias into the initial accumulator value.
                acc_ref[...] = jnp.broadcast_to(
                    b_ref[...].astype(jnp.float32), acc_ref.shape)
            else:
                acc_ref[...] = jnp.zeros_like(acc_ref)

        # MXU matmul with f32 accumulation; no materialized weight transpose.
        acc_ref[...] += jax.lax.dot_general(
            x_ref[...],
            w_ref[...],
            dimension_numbers=dnums,
            preferred_element_type=jnp.float32,
        )

        if use_acc_scratch:
            @pl.when(k == pl.num_programs(2) - 1)
            def _finalize():
                acc = acc_ref[...]
                if b_ref is not None:
                    acc = acc + b_ref[...].astype(jnp.float32)
                o_ref[...] = acc.astype(o_ref.dtype)

    return kernel


# ----------------------------------------------------------------------------
# Hardware probes (best effort, safe fallbacks) & tile selection
# ----------------------------------------------------------------------------
_DEFAULT_BB = 512
_DEFAULT_BN = 1024


def _round_up(v, m):
    return ((v + m - 1) // m) * m


def _vmem_budget_and_limit():
    """(tile-footprint budget, vmem_limit_bytes). Conservative default fits
    v5e / v6e / v7x; raised when the chip has >=128 MiB physical VMEM."""
    budget, limit = 20 * 1024 * 1024, 40 * 1024 * 1024
    try:
        cap = int(pltpu.get_tpu_info().vmem_capacity_bytes)
        if cap >= 128 * 1024 * 1024:          # v5e / v6e
            budget, limit = 48 * 1024 * 1024, 96 * 1024 * 1024
    except Exception:
        pass
    return budget, limit


def _two_tensorcores_per_chip():
    # v7x shards "parallel" grid axes across 2 TensorCores; make sure both get
    # work.  Best-effort detection; False is the safe default for v5e/v6e
    # (splitting would cost one extra weight re-stream there).
    try:
        kind = jax.devices()[0].device_kind.lower()
        return ("v7" in kind) or ("7x" in kind)
    except Exception:
        return False


def _select_tiles(B, N, K, compute_isz, out_isz, acc_separate, has_bias,
                  split_for_cores, budget):
    bb = B if B <= _DEFAULT_BB else _DEFAULT_BB
    bn = N if N <= _DEFAULT_BN else _DEFAULT_BN

    # v7x: guarantee >=2 blocks along a parallel axis so both cores are busy.
    if split_for_cores and pl.cdiv(B, bb) == 1 and pl.cdiv(N, bn) == 1:
        if B >= 16:
            bb = _round_up(pl.cdiv(B, 2), 8)
        elif N >= 256:
            bn = _round_up(pl.cdiv(N, 2), 128)

    def footprint(bk):
        f = 2 * bb * bk * compute_isz          # x tile, double buffered
        f += 2 * bn * bk * compute_isz         # weight tile, double buffered
        f += 2 * bb * bn * out_isz             # output tile, double buffered
        if has_bias:
            f += 2 * bn * 4                    # bias tile
        if acc_separate:
            f += bb * bn * 4                   # f32 accumulator scratch
        return f

    if footprint(K) <= budget:
        bk = K                                 # full K: single reduction step
    else:
        bk = 256                               # largest 256-multiple that fits
        while bk + 256 < K and footprint(bk + 256) <= budget:
            bk += 256
    return bb, bn, bk


# ----------------------------------------------------------------------------
# Wrapper
# ----------------------------------------------------------------------------
def linear_fa_forward(x, weight, bias=None, *, weight_layout="nk",
                      compute_dtype=jnp.bfloat16, out_dtype=None,
                      block_b=None, block_n=None, block_k=None):
    """out = x @ W.T + bias, tiled Pallas TPU GEMM.

    x:      (B, K)
    weight: (N, K) if weight_layout == "nk"  (PyTorch-native layout)
            (K, N) if weight_layout == "kn"  (pre-transposed, avoids any
                                              in-kernel transpose)
    bias:   (N,) or None

    Operands stream in `compute_dtype` (bf16 by default: MXU-native and half
    the HBM bytes) with an f32 accumulator — the usual bf16-matmul numerics
    trade-off, fine for feedback-alignment training.  Use
    compute_dtype=jnp.float32 for bit-faithful f32.
    """
    B, K = x.shape
    if weight_layout == "nk":
        N, Kw = weight.shape
        rhs_contract_dim = 1
    elif weight_layout == "kn":
        Kw, N = weight.shape
        rhs_contract_dim = 0
    else:
        raise ValueError(f"unknown weight_layout: {weight_layout!r}")
    assert K == Kw, "input_features mismatch"

    out_dtype = x.dtype if out_dtype is None else jnp.dtype(out_dtype)
    has_bias = bias is not None
    # f32 output: accumulate directly in the K-resident output tile (no
    # scratch, no finalize pass).  Other output dtypes keep an f32 scratch.
    use_acc_scratch = jnp.dtype(out_dtype) != jnp.dtype(jnp.float32)

    compute_isz = jnp.dtype(compute_dtype).itemsize
    out_isz = jnp.dtype(out_dtype).itemsize

    budget, vmem_limit = _vmem_budget_and_limit()
    bb, bn, bk = _select_tiles(B, N, K, compute_isz, out_isz, use_acc_scratch,
                               has_bias, _two_tensorcores_per_chip(), budget)
    if block_b is not None:
        bb = min(block_b, B)
    if block_n is not None:
        bn = min(block_n, N)
    if block_k is not None:
        bk = min(block_k, K)

    # Cast operands for the MXU; zero-pad K so a partial reduction block never
    # feeds garbage into the accumulator (padded B/N tails are store-masked).
    x_c = x.astype(compute_dtype)
    w_c = weight.astype(compute_dtype)
    Kp = K
    if bk < K and K % bk != 0:
        Kp = _round_up(K, bk)
        pad = Kp - K
        x_c = jnp.pad(x_c, ((0, 0), (0, pad)))
        if weight_layout == "nk":
            w_c = jnp.pad(w_c, ((0, 0), (0, pad)))
        else:
            w_c = jnp.pad(w_c, ((0, pad), (0, 0)))

    grid = (pl.cdiv(B, bb), pl.cdiv(N, bn), Kp // bk)

    in_specs = [pl.BlockSpec((bb, bk), lambda i, j, k: (i, k))]
    if weight_layout == "nk":
        in_specs.append(pl.BlockSpec((bn, bk), lambda i, j, k: (j, k)))
    else:
        in_specs.append(pl.BlockSpec((bk, bn), lambda i, j, k: (k, j)))
    inputs = [x_c, w_c]
    if has_bias:
        in_specs.append(pl.BlockSpec((1, bn), lambda i, j, k: (0, j)))
        inputs.append(jnp.asarray(bias, jnp.float32).reshape(1, N))

    scratch_shapes = []
    if use_acc_scratch:
        scratch_shapes.append(pltpu.VMEM((bb, bn), jnp.float32))

    # Advisory cost: bytes actually streamed (weight re-read once per B block,
    # x re-read once per N block), helps XLA schedule around the custom call.
    cost = pl.CostEstimate(
        flops=2 * B * K * N,
        transcendentals=0,
        bytes_accessed=int(grid[1] * B * Kp * compute_isz
                           + grid[0] * N * Kp * compute_isz
                           + B * N * out_isz
                           + (N * 4 if has_bias else 0)),
    )

    kernel = _make_linear_fa_kernel(has_bias, use_acc_scratch, rhs_contract_dim)

    return pl.pallas_call(
        kernel,
        out_shape=jax.ShapeDtypeStruct((B, N), out_dtype),
        grid_spec=pltpu.PrefetchScalarGridSpec(
            num_scalar_prefetch=0,
            grid=grid,
            in_specs=in_specs,
            out_specs=pl.BlockSpec((bb, bn), lambda i, j, k: (i, j)),
            scratch_shapes=scratch_shapes,
        ),
        compiler_params=pltpu.CompilerParams(
            dimension_semantics=("parallel", "parallel", "arbitrary"),
            vmem_limit_bytes=vmem_limit,
        ),
        cost_estimate=cost,
    )(*inputs)


# ----------------------------------------------------------------------------
# Module
# ----------------------------------------------------------------------------
def _kaiming_uniform(key, shape):
    # torch.nn.init.kaiming_uniform (a=0, fan_in = shape[1] for a 2-D weight):
    # bound = sqrt(6 / fan_in)
    fan_in = shape[1]
    bound = math.sqrt(6.0 / fan_in)
    return jax.random.uniform(key, shape, jnp.float32, minval=-bound, maxval=bound)


class LinearFeedbackAlignment:
    """JAX/Pallas counterpart of LinearFeedbackAlignmentModule (forward only)."""

    def __init__(self, input_features, output_features, key, bias=True):
        k_w, k_fa = jax.random.split(key)
        self.input_features = input_features
        self.output_features = output_features
        self.weight = _kaiming_uniform(k_w, (output_features, input_features))
        # weight_fa only participates in the feedback-alignment backward pass.
        self.weight_fa = _kaiming_uniform(k_fa, (output_features, input_features))
        # torch.nn.init.constant(self.bias, 1)
        self.bias = jnp.ones((output_features,), jnp.float32) if bias else None
        # Pre-transposed, pre-cast forward copy: (K, N) bf16.  Free at call
        # time (persistent parameter); the kernel then uses the plain
        # ((1,),(0,)) contraction with no in-kernel transpose and half the
        # weight HBM bytes.
        self._weight_kn = self.weight.T.astype(jnp.bfloat16)
        # TODO(synk): feedback-alignment backward (grad_input = g @ weight_fa)
        # is not implemented here; forward parity only.

    def __call__(self, x):
        B, K = x.shape
        N = self.output_features
        # Tiny-shape dispatcher: output last dim <128 forces masked partial
        # stores, and pallas_call overhead dominates tiny GEMMs — let XLA's
        # fused matmul handle those.
        if N < 128 or B < 8 or (B * K + N * K + B * N) * 4 <= (1 << 20):
            out = x @ self.weight.T
            if self.bias is not None:
                out = out + self.bias[None, :]
            return out
        return linear_fa_forward(x, self._weight_kn, self.bias,
                                 weight_layout="kn")


# ----------------------------------------------------------------------------
# Demo / correctness check
# ----------------------------------------------------------------------------
if __name__ == "__main__":
    key = jax.random.PRNGKey(0)
    k_x, k_mod, k_x2, k_w2, k_b2, k_x3, k_w3 = jax.random.split(key, 7)

    # --- Test A: module at small shapes (dispatches to jnp.dot; exact) ------
    batch, in_features, out_features = 8, 32, 64
    x = jax.random.normal(k_x, (batch, in_features), jnp.float32)
    mod = LinearFeedbackAlignment(in_features, out_features, k_mod, bias=True)
    out = jax.block_until_ready(mod(x))
    ref = x @ mod.weight.T + mod.bias[None, :]
    assert out.shape == (batch, out_features)
    assert jnp.allclose(out, ref, atol=1e-5, rtol=1e-5), "module small-shape mismatch"

    # --- Test B: kernel on the same small single-block shapes (bf16 compute)
    out_b = jax.block_until_ready(linear_fa_forward(x, mod.weight, mod.bias))
    err_b = float(jnp.max(jnp.abs(out_b - ref)))
    assert out_b.shape == ref.shape
    assert err_b < 0.1, f"small-shape kernel mismatch, abs_err={err_b}"

    # --- Test C: tiled path with bias + K padding (K=640 with block_k=256) --
    B2, K2, N2 = 512, 640, 1024
    x2 = jax.random.normal(k_x2, (B2, K2), jnp.float32)
    w2 = jax.random.normal(k_w2, (N2, K2), jnp.float32) * (1.0 / math.sqrt(K2))
    b2 = jax.random.normal(k_b2, (N2,), jnp.float32)
    out2 = jax.block_until_ready(linear_fa_forward(x2, w2, b2, block_k=256))
    ref2 = x2 @ w2.T + b2[None, :]
    rel2 = float(jnp.max(jnp.abs(out2 - ref2)) / (jnp.max(jnp.abs(ref2)) + 1e-6))
    assert out2.shape == (B2, N2)
    assert rel2 < 2e-2, f"tiled-path mismatch, rel_err={rel2}"

    # --- Test D: no-bias + pre-transposed (K, N) weight layout --------------
    B3, K3, N3 = 256, 384, 512
    x3 = jax.random.normal(k_x3, (B3, K3), jnp.float32)
    w3_kn = jax.random.normal(k_w3, (K3, N3), jnp.float32) * (1.0 / math.sqrt(K3))
    out3 = jax.block_until_ready(
        linear_fa_forward(x3, w3_kn, None, weight_layout="kn"))
    ref3 = x3 @ w3_kn
    rel3 = float(jnp.max(jnp.abs(out3 - ref3)) / (jnp.max(jnp.abs(ref3)) + 1e-6))
    assert rel3 < 2e-2, f"kn-layout mismatch, rel_err={rel3}"

    # --- Test E: non-f32 output exercises the scratch-accumulator variant ---
    out3b = jax.block_until_ready(
        linear_fa_forward(x3, w3_kn, None, weight_layout="kn",
                          out_dtype=jnp.bfloat16))
    rel3b = float(jnp.max(jnp.abs(out3b.astype(jnp.float32) - ref3))
                  / (jnp.max(jnp.abs(ref3)) + 1e-6))
    assert out3b.dtype == jnp.bfloat16
    assert rel3b < 5e-2, f"bf16-output mismatch, rel_err={rel3b}"

    print("KERNEL_OK")
</pallas_src>

<mosaic_0001>
module attributes {stable_mosaic.version = 11 : i64} {
  func.func @kernel(%arg0: i32, %arg1: i32, %arg2: i32, %arg3: memref<8x32xbf16, #tpu.memory_space<vmem>>, %arg4: memref<64x32xbf16, #tpu.memory_space<vmem>>, %arg5: memref<1x64xf32, #tpu.memory_space<vmem>>, %arg6: memref<8x64xf32, #tpu.memory_space<vmem>>) attributes {dimension_semantics = [#tpu.dimension_semantics<parallel>, #tpu.dimension_semantics<parallel>, #tpu.dimension_semantics<arbitrary>], iteration_bounds = array<i64: 1, 1, 1>, scalar_prefetch = 0 : i64, scratch_operands = 0 : i64, tpu.core_type = #tpu.core_type<tc>, window_params = [{transform_indices = @transform_0, window_bounds = array<i64: 8, 32>}, {transform_indices = @transform_1, window_bounds = array<i64: 64, 32>}, {transform_indices = @transform_2, window_bounds = array<i64: 1, 64>}, {transform_indices = @transform_3, window_bounds = array<i64: 8, 64>}]} {
    %c0_i32 = arith.constant 0 : i32
    %0 = arith.cmpi eq, %arg2, %c0_i32 : i32
    %1 = arith.extui %0 : i1 to i32
    %c0_i32_0 = arith.constant 0 : i32
    %2 = arith.cmpi ne, %1, %c0_i32_0 : i32
    scf.if %2 {
      %c0_8 = arith.constant 0 : index
      %c0_9 = arith.constant 0 : index
      %9 = vector.load %arg5[%c0_8, %c0_9] : memref<1x64xf32, #tpu.memory_space<vmem>>, vector<1x64xf32>
      %10 = vector.shape_cast %9 : vector<1x64xf32> to vector<1x64xf32>
      %11 = vector.broadcast %10 : vector<1x64xf32> to vector<8x64xf32>
      %c0_10 = arith.constant 0 : index
      %c0_11 = arith.constant 0 : index
      %12 = vector.load %arg6[%c0_10, %c0_11] : memref<8x64xf32, #tpu.memory_space<vmem>>, vector<8x64xf32>
      tpu.vector_store %arg6[%c0_10, %c0_11], %11 {strides = array<i32>} : memref<8x64xf32, #tpu.memory_space<vmem>>, vector<8x64xf32>,
    } else {
    }
    %c0 = arith.constant 0 : index
    %c0_1 = arith.constant 0 : index
    %3 = vector.load %arg6[%c0, %c0_1] : memref<8x64xf32, #tpu.memory_space<vmem>>, vector<8x64xf32>
    %c0_2 = arith.constant 0 : index
    %c0_3 = arith.constant 0 : index
    %4 = vector.load %arg3[%c0_2, %c0_3] : memref<8x32xbf16, #tpu.memory_space<vmem>>, vector<8x32xbf16>
    %c0_4 = arith.constant 0 : index
    %c0_5 = arith.constant 0 : index
    %5 = vector.load %arg4[%c0_4, %c0_5] : memref<64x32xbf16, #tpu.memory_space<vmem>>, vector<64x32xbf16>
    %cst = arith.constant dense<0.000000e+00> : vector<8x64xf32>
    %6 = tpu.matmul %4, %5, %cst {dimension_numbers = #tpu.dot_dimension_numbers<[1], [1], [0], [0], [0, 0, 1, 0], [], []>} : vector<8x32xbf16>, vector<64x32xbf16>, vector<8x64xf32> -> vector<8x64xf32>
    %7 = arith.addf %3, %6 : vector<8x64xf32>
    %c0_6 = arith.constant 0 : index
    %c0_7 = arith.constant 0 : index
    %8 = vector.load %arg6[%c0_6, %c0_7] : memref<8x64xf32, #tpu.memory_space<vmem>>, vector<8x64xf32>
    tpu.vector_store %arg6[%c0_6, %c0_7], %7 {strides = array<i32>} : memref<8x64xf32, #tpu.memory_space<vmem>>, vector<8x64xf32>,
    return
  }
  func.func @transform_0(%arg0: i32, %arg1: i32, %arg2: i32) -> (i32, i32) {
    %c0_i32 = arith.constant 0 : i32
    return %arg0, %arg2 : i32, i32
  }
  func.func @transform_1(%arg0: i32, %arg1: i32, %arg2: i32) -> (i32, i32) {
    %c0_i32 = arith.constant 0 : i32
    return %arg1, %arg2 : i32, i32
  }
  func.func @transform_2(%arg0: i32, %arg1: i32, %arg2: i32) -> (i32, i32) {
    %c0_i32 = arith.constant 0 : i32
    %c0_i32_0 = arith.constant 0 : i32
    return %c0_i32, %arg1 : i32, i32
  }
  func.func @transform_3(%arg0: i32, %arg1: i32, %arg2: i32) -> (i32, i32) {
    %c0_i32 = arith.constant 0 : i32
    return %arg0, %arg1 : i32, i32
  }
}

</mosaic_0001>

<llo_original>
// kernel: tpu_custom_call.1
$region0: #{tpu_custom_call.1}
  #allocation0 [shape = 'u32[]', space=smem, size = 0x4, offset = 0x4, fixed_abs, tag = 'smem constant byte address 0x4 - core index']
  #allocation1 [shape = 'u32[144,128]{1,0:T(1,128)}', space=vmem, size = 0x12000, scoped, tag = 'internal scratch']
  %s0 = inlined_call_operand.vmem [shape: bf16[8,32], index: 0, kind: input, shape index: {}]
  %s1 = inlined_call_operand.vmem [shape: bf16[64,32], index: 1, kind: input, shape index: {}]
  %s2 = inlined_call_operand.vmem [shape: f32[1,64], index: 2, kind: input, shape index: {}]
  %s3 = inlined_call_operand.hbm [shape: f32[8,64], index: 3, kind: output, shape index: {}]
  %s4 = sld [smem:[#allocation0]]
  $region26: #{tpu_custom_call.1} parent=0
    _
  %s6 = ssub.s32 1, %s4
  %s7 = scalar_select 0, %s6, %s4
  $region1: #{tpu_custom_call.1} parent=0
    #allocation2 [shape = 'u8[4096]{0}', space=vmem, size = 0x1000, scoped, tag = 'output window, operand 0, single buffered']
    #allocation3 [shape = 's32[1]{0}', space=sflag, size = 0x4, scoped, tag = 'scoped memory for tpu_custom_call.1']
    %8 = vsyncpa [#allocation3], 0
    // Predicated region
    $region2: #{tpu_custom_call.1} parent=1 // pred_check
      _
    $region3: #{tpu_custom_call.1} parent=1 // pred_check_branch
      %10 = sbr.rel (0) target = $region5
    $region4: #{tpu_custom_call.1} parent=1 // pred_region
      _
    $region5: #{tpu_custom_call.1} parent=1 // pred_fallthru
      _
    // Predicated region
    $region6: #{tpu_custom_call.1} parent=1 // pred_check
      _
    $region7: #{tpu_custom_call.1} parent=1 // pred_check_branch
      %12 = sbr.rel (0) target = $region9
    $region8: #{tpu_custom_call.1} parent=1 // pred_region
      _
    $region9: #{tpu_custom_call.1} parent=1 // pred_fallthru
      _
    // Predicated region
    $region10: #{tpu_custom_call.1} parent=1 // pred_check
      _
    $region11: #{tpu_custom_call.1} parent=1 // pred_check_branch
      %14 = sbr.rel (0) target = $region13
    $region12: #{tpu_custom_call.1} parent=1 // pred_region
      _
    $region13: #{tpu_custom_call.1} parent=1 // pred_fallthru
      _
    %p16 = scmp.eq.s32.totalorder 0, 0
    // Predicated region
    $region14: #{tpu_custom_call.1} parent=1 // pred_check
      %p17 = pneg %p16
    $region15: #{tpu_custom_call.1} parent=1 // pred_check_branch
      %19 = sbr.rel (%p17) target = $region17
    $region16: #{tpu_custom_call.1} parent=1 // pred_region
      %v20 = vld [vmem:[%s2] sm:$0x1]
      %v22 = vlaneseq
      %v23 = vshrl.u32 %v22, 7
      %v24 = vsub.s32 0, %v23
      %v25 = vrot.slane %v20, %v24
      %vm27 = vcmask 523264
      %28 = vst.msk [vmem:[#allocation2] sm:$0xff] %vm27, %v25
    $region17: #{tpu_custom_call.1} parent=1 // pred_fallthru
      _
    %v29 = vld [vmem:[#allocation2] sm:$0xff]
    %v30 = vld [vmem:[%s0] sm:$0xf]
    %v31 = vld [vmem:[%s1] sm:$0xf]
    %v32 = vld [vmem:[%s1 + $0x4] sm:$0xf]
    %v33 = vld [vmem:[%s1 + $0x8] sm:$0xf]
    %v34 = vld [vmem:[%s1 + $0xc] sm:$0xf]
    %v35 = vld [vmem:[%s1 + $0x10] sm:$0xf]
    %v36 = vld [vmem:[%s1 + $0x14] sm:$0xf]
    %v37 = vld [vmem:[%s1 + $0x18] sm:$0xf]
    %v38 = vld [vmem:[%s1 + $0x1c] sm:$0xf]
    %v47 = vunpack.c.l.b16 %v31
    %v48 = vunpack.c.l.b16 %v32
    %v49 = vunpack.c.l.b16 %v33
    %v50 = vunpack.c.l.b16 %v34
    %v51 = vunpack.c.l.b16 %v35
    %v52 = vunpack.c.l.b16 %v36
    %v53 = vunpack.c.l.b16 %v37
    %v54 = vunpack.c.l.b16 %v38
    %v55 = vpack.c.b16 %v48, %v47
    %v56 = vpack.c.b16 %v50, %v49
    %v57 = vpack.c.b16 %v52, %v51
    %v58 = vpack.c.b16 %v54, %v53
    %vm59 = vcmask 261120
    %v61 = vsel %vm59, %v30, 0
    %v64 = vsel %vm59, %v55, 0
    %v67 = vsel %vm59, %v56, 0
    %v70 = vsel %vm59, %v57, 0
    %v73 = vsel %vm59, %v58, 0
    %75 = vmatprep.subr.bf16.mxu0 0
    %76 = vmatpush1.bf16.xpose.msra.mxu0 0
    %77 = vmatprep.subr.bf16.mxu0 0
    %78 = vmatpush1.bf16.xpose.msra.mxu0 0
    %79 = vmatprep.subr.bf16.mxu0 0
    %80 = vmatpush1.bf16.xpose.msra.mxu0 0
    %81 = vmatprep.subr.bf16.mxu0 0
    %82 = vmatpush1.bf16.xpose.msra.mxu0 0
    %83 = vmatprep.subr.bf16.mxu0 0
    %84 = vmatpush1.bf16.xpose.msra.mxu0 %v73
    %85 = vmatprep.subr.bf16.mxu0 0
    %86 = vmatpush1.bf16.xpose.msra.mxu0 %v70
    %87 = vmatprep.subr.bf16.mxu0 0
    %88 = vmatpush1.bf16.xpose.msra.mxu0 %v67
    %89 = vmatprep.subr.bf16.mxu0 0
    %90 = vmatpush1.bf16.xpose.msra.mxu0 %v64
    %91 = vmatprep.subr.bf16.mxu0 0
    %92 = vmatpush2.bf16.xpose.msra.mxu0 0
    %93 = vmatprep.subr.bf16.mxu0 0
    %94 = vmatpush2.bf16.xpose.msra.mxu0 0
    %95 = vmatprep.subr.bf16.mxu0 0
    %96 = vmatpush2.bf16.xpose.msra.mxu0 0
    %97 = vmatprep.subr.bf16.mxu0 0
    %98 = vmatpush2.bf16.xpose.msra.mxu0 0
    %99 = vmatprep.subr.bf16.mxu0 0
    %100 = vmatpush2.bf16.xpose.msra.mxu0 0
    %101 = vmatprep.subr.bf16.mxu0 0
    %102 = vmatpush2.bf16.xpose.msra.mxu0 0
    %103 = vmatprep.subr.bf16.mxu0 0
    %104 = vmatpush2.bf16.xpose.msra.mxu0 0
    %105 = vmatprep.subr.bf16.mxu0 0
    %106 = vmatpush2.bf16.xpose.msra.mxu0 0
    %107 = vmatprep.mubr.bf16.mxu0 0
    %108 = vmatmul.mubr.bf16.gmra.mxu0 %v61
    %v109 = vpop.f32.mrf.mxu0
    %v110 = vadd.f32 0.0, %v109
    %v111 = vpop.f32.mrf.mxu0
    %v112 = vpop.f32.mrf.mxu0
    %v113 = vpop.f32.mrf.mxu0
    %114 = vdwg.mxu0
    %v115 = vadd.f32 %v29, %v110
    %vm116 = vcmask 523264
    %117 = vst.msk [vmem:[#allocation2] sm:$0xff] %vm116, %v115
    // Predicated region
    $region18: #{tpu_custom_call.1} parent=1 // pred_check
      _
    $region19: #{tpu_custom_call.1} parent=1 // pred_check_branch
      %119 = sbr.rel (0) target = $region21
    $region20: #{tpu_custom_call.1} parent=1 // pred_region
      %s121 = ssub.s32 128, 128
      %122 = vsyncadd [#allocation3], %s121
      %s124 = sshll.u32 [#allocation2], 4
      %s125 = int_to_ptr.vmem [resolvable:$true] %s124
      %127 = dma.vmem_to_hbm [thread:$0]  %s125, 128, %s3, [#allocation3]
    $region21: #{tpu_custom_call.1} parent=1 // pred_fallthru
      _
    // Predicated region
    $region22: #{tpu_custom_call.1} parent=1 // pred_check
      _
    $region23: #{tpu_custom_call.1} parent=1 // pred_check_branch
      %129 = sbr.rel (0) target = $region25
    $region24: #{tpu_custom_call.1} parent=1 // pred_region
      %130 = dma.done [#allocation3], 128
    $region25: #{tpu_custom_call.1} parent=1 // pred_fallthru
      _
    %131 = vsyncpa [#allocation3], 1

</llo_original>
